<compile_context>
chip_gen: v5e
topology: v5e:2x2
jax: 0.10.0
libtpu: 0.0.40
codegen_flags: <defaults>
</compile_context>

<pallas_src>
import math

import jax
import jax.numpy as jnp
from jax import lax
from jax.experimental import pallas as pl
from jax.experimental.pallas import tpu as pltpu


def _round_up(x, m):
    return ((x + m - 1) // m) * m


# ---------------------------------------------------------------------------
# Fused kernel: for each (batch tile, time chunk) grid step, run `tc` serial
# steps of  h_t = tanh(X_t @ W_xh + h_{t-1} @ W_hh + b_h).
# ---------------------------------------------------------------------------
def _rnn_kernel(x_ref, h0_ref, wxh_ref, whh_ref, b_ref, out_ref, h_scratch):
    # Initialize the carried hidden state at the start of each batch tile's
    # time loop (time is the innermost / "arbitrary" grid axis).
    @pl.when(pl.program_id(1) == 0)
    def _():
        h_scratch[...] = h0_ref[...]

    tc, bt, hp = out_ref.shape

    # Hoist weight / bias loads (and the bias broadcast) out of the time loop.
    wxh = wxh_ref[...]                                   # (I,  Hp) bf16
    whh = whh_ref[...]                                   # (Hp, Hp) bf16
    bias = jnp.broadcast_to(b_ref[...], (bt, hp))        # (bt, Hp) f32

    def step(i, h):
        xp = jnp.dot(x_ref[i], wxh, preferred_element_type=jnp.float32)
        hp_ = jnp.dot(h.astype(whh.dtype), whh,
                      preferred_element_type=jnp.float32)
        h_new = jnp.tanh(xp + hp_ + bias)
        out_ref[i] = h_new.astype(out_ref.dtype)
        return h_new

    h_scratch[...] = lax.fori_loop(0, tc, step, h_scratch[...], unroll=True)


def rnn_scratch_forward(inputs, W_xh, W_hh, b_h, state=None, *, tc=8, bt=None):
    """inputs: (T, B, I). Returns (outputs (T, B, H), final_state (B, H))."""
    T, B, I = inputs.shape
    H = W_xh.shape[1]

    Bp = _round_up(B, 8)       # sublane-dense batch
    Hp = _round_up(H, 128)     # lane-dense hidden
    tc = max(1, min(tc, T))    # timesteps per grid step
    Tp = _round_up(T, tc)
    bt = Bp if bt is None else bt
    assert Bp % bt == 0 and bt % 8 == 0

    # --- pad to dense layouts (zero padding is inert) -----------------------
    x_p = jnp.pad(inputs.astype(jnp.float32),
                  ((0, Tp - T), (0, Bp - B), (0, 0))).astype(jnp.bfloat16)
    wxh_p = jnp.pad(W_xh, ((0, 0), (0, Hp - H))).astype(jnp.bfloat16)
    whh_p = jnp.pad(W_hh, ((0, Hp - H), (0, Hp - H))).astype(jnp.bfloat16)
    bh_p = jnp.pad(b_h, (0, Hp - H)).astype(jnp.float32).reshape(1, Hp)

    if state is None:
        h0_p = jnp.zeros((Bp, Hp), jnp.float32)
    else:
        (h0,) = state
        h0_p = jnp.pad(h0.astype(jnp.float32), ((0, Bp - B), (0, Hp - H)))

    outputs_p = pl.pallas_call(
        _rnn_kernel,
        out_shape=jax.ShapeDtypeStruct((Tp, Bp, Hp), jnp.float32),
        grid_spec=pltpu.PrefetchScalarGridSpec(
            num_scalar_prefetch=0,
            grid=(Bp // bt, Tp // tc),
            in_specs=[
                pl.BlockSpec((tc, bt, I), lambda b, t: (t, b, 0)),  # X chunk
                pl.BlockSpec((bt, Hp), lambda b, t: (b, 0)),        # h0 tile
                pl.BlockSpec((I, Hp), lambda b, t: (0, 0)),         # W_xh
                pl.BlockSpec((Hp, Hp), lambda b, t: (0, 0)),        # W_hh
                pl.BlockSpec((1, Hp), lambda b, t: (0, 0)),         # b_h
            ],
            out_specs=pl.BlockSpec((tc, bt, Hp), lambda b, t: (t, b, 0)),
            scratch_shapes=[pltpu.VMEM((bt, Hp), jnp.float32)],     # carried h
        ),
        compiler_params=pltpu.CompilerParams(
            dimension_semantics=("parallel", "arbitrary"),
        ),
    )(x_p, h0_p, wxh_p, whh_p, bh_p)

    outputs = outputs_p[:T, :B, :H].astype(inputs.dtype)
    final_state = outputs[T - 1]
    return outputs, final_state


# ---------------------------------------------------------------------------
# Pure-JAX reference (mirrors the PyTorch module, f32 throughout).
# ---------------------------------------------------------------------------
def rnn_scratch_reference(inputs, W_xh, W_hh, b_h, state=None):
    T, B, I = inputs.shape
    H = W_xh.shape[1]
    h = jnp.zeros((B, H), jnp.float32) if state is None else state[0]
    outs = []
    for t in range(T):
        h = jnp.tanh(inputs[t] @ W_xh + h @ W_hh + b_h)
        outs.append(h)
    return jnp.stack(outs, axis=0), h


if __name__ == "__main__":
    key = jax.random.PRNGKey(0)
    k_in, k_wxh, k_whh, k_bh = jax.random.split(key, 4)

    T, B, num_inputs, num_hiddens = 12, 4, 16, 32
    sigma = 0.01

    # Deterministic parameters (same shapes/scales as the module __init__).
    W_xh = jax.random.normal(k_wxh, (num_inputs, num_hiddens), jnp.float32) * sigma
    W_hh = jax.random.normal(k_whh, (num_hiddens, num_hiddens), jnp.float32) * sigma
    b_h = jax.random.normal(k_bh, (num_hiddens,), jnp.float32) * sigma

    inputs = jax.random.normal(k_in, (T, B, num_inputs), jnp.float32)

    outputs, final_state = rnn_scratch_forward(inputs, W_xh, W_hh, b_h, tc=8)
    outputs = jax.block_until_ready(outputs)
    final_state = jax.block_until_ready(final_state)

    ref_out, ref_h = rnn_scratch_reference(inputs, W_xh, W_hh, b_h)

    # bf16 matmul operands with f32 accumulation -> modest tolerance vs f32 ref.
    assert outputs.shape == (T, B, num_hiddens)
    assert final_state.shape == (B, num_hiddens)
    assert jnp.allclose(outputs, ref_out, atol=2e-3, rtol=2e-2), (
        float(jnp.max(jnp.abs(outputs - ref_out))))
    assert jnp.allclose(final_state, ref_h, atol=2e-3, rtol=2e-2)

    print("KERNEL_OK")
</pallas_src>

<mosaic_0001>
module attributes {stable_mosaic.version = 11 : i64} {
  func.func @_rnn_kernel(%arg0: i32, %arg1: i32, %arg2: memref<8x8x16xbf16, #tpu.memory_space<vmem>>, %arg3: memref<8x128xf32, #tpu.memory_space<vmem>>, %arg4: memref<16x128xbf16, #tpu.memory_space<vmem>>, %arg5: memref<128x128xbf16, #tpu.memory_space<vmem>>, %arg6: memref<1x128xf32, #tpu.memory_space<vmem>>, %arg7: memref<8x8x128xf32, #tpu.memory_space<vmem>>, %arg8: memref<8x128xf32, #tpu.memory_space<vmem>>) attributes {dimension_semantics = [#tpu.dimension_semantics<parallel>, #tpu.dimension_semantics<arbitrary>], iteration_bounds = array<i64: 1, 2>, scalar_prefetch = 0 : i64, scratch_operands = 1 : i64, tpu.core_type = #tpu.core_type<tc>, window_params = [{transform_indices = @transform_0, window_bounds = array<i64: 8, 8, 16>}, {transform_indices = @transform_1, window_bounds = array<i64: 8, 128>}, {pipeline_mode = #tpu.pipeline_mode<synchronous>, transform_indices = @transform_2, window_bounds = array<i64: 16, 128>}, {pipeline_mode = #tpu.pipeline_mode<synchronous>, transform_indices = @transform_3, window_bounds = array<i64: 128, 128>}, {pipeline_mode = #tpu.pipeline_mode<synchronous>, transform_indices = @transform_4, window_bounds = array<i64: 1, 128>}, {transform_indices = @transform_5, window_bounds = array<i64: 8, 8, 128>}]} {
    %c0_i32 = arith.constant 0 : i32
    %0 = arith.cmpi eq, %arg1, %c0_i32 : i32
    %1 = arith.extui %0 : i1 to i32
    %c0_i32_0 = arith.constant 0 : i32
    %2 = arith.cmpi ne, %1, %c0_i32_0 : i32
    scf.if %2 {
      %c0_58 = arith.constant 0 : index
      %c0_59 = arith.constant 0 : index
      %114 = vector.load %arg3[%c0_58, %c0_59] : memref<8x128xf32, #tpu.memory_space<vmem>>, vector<8x128xf32>
      %c0_60 = arith.constant 0 : index
      %c0_61 = arith.constant 0 : index
      %115 = vector.load %arg8[%c0_60, %c0_61] : memref<8x128xf32, #tpu.memory_space<vmem>>, vector<8x128xf32>
      tpu.vector_store %arg8[%c0_60, %c0_61], %114 {strides = array<i32>} : memref<8x128xf32, #tpu.memory_space<vmem>>, vector<8x128xf32>,
    } else {
    }
    %c0 = arith.constant 0 : index
    %c0_1 = arith.constant 0 : index
    %3 = vector.load %arg4[%c0, %c0_1] : memref<16x128xbf16, #tpu.memory_space<vmem>>, vector<16x128xbf16>
    %c0_2 = arith.constant 0 : index
    %c0_3 = arith.constant 0 : index
    %4 = vector.load %arg5[%c0_2, %c0_3] : memref<128x128xbf16, #tpu.memory_space<vmem>>, vector<128x128xbf16>
    %c0_4 = arith.constant 0 : index
    %c0_5 = arith.constant 0 : index
    %5 = vector.load %arg6[%c0_4, %c0_5] : memref<1x128xf32, #tpu.memory_space<vmem>>, vector<1x128xf32>
    %6 = vector.shape_cast %5 : vector<1x128xf32> to vector<1x128xf32>
    %7 = vector.broadcast %6 : vector<1x128xf32> to vector<8x128xf32>
    %c0_6 = arith.constant 0 : index
    %c0_7 = arith.constant 0 : index
    %8 = vector.load %arg8[%c0_6, %c0_7] : memref<8x128xf32, #tpu.memory_space<vmem>>, vector<8x128xf32>
    %c0_i32_8 = arith.constant 0 : i32
    %9 = arith.index_cast %c0_i32_8 : i32 to index
    %c0_9 = arith.constant 0 : index
    %c0_10 = arith.constant 0 : index
    %10 = vector.load %arg2[%9, %c0_9, %c0_10] : memref<8x8x16xbf16, #tpu.memory_space<vmem>>, vector<1x8x16xbf16>
    %11 = vector.shape_cast %10 : vector<1x8x16xbf16> to vector<8x16xbf16>
    %cst = arith.constant dense<0.000000e+00> : vector<8x128xf32>
    %12 = tpu.matmul %11, %3, %cst {dimension_numbers = #tpu.dot_dimension_numbers<[1], [0], [0], [1], [0, 0, 1, 1], [], []>} : vector<8x16xbf16>, vector<16x128xbf16>, vector<8x128xf32> -> vector<8x128xf32>
    %13 = arith.truncf %8 : vector<8x128xf32> to vector<8x128xbf16>
    %cst_11 = arith.constant dense<0.000000e+00> : vector<8x128xf32>
    %14 = tpu.matmul %13, %4, %cst_11 {dimension_numbers = #tpu.dot_dimension_numbers<[1], [0], [0], [1], [0, 0, 1, 1], [], []>} : vector<8x128xbf16>, vector<128x128xbf16>, vector<8x128xf32> -> vector<8x128xf32>
    %15 = arith.addf %12, %14 : vector<8x128xf32>
    %16 = arith.addf %15, %7 : vector<8x128xf32>
    %17 = math.tanh %16 : vector<8x128xf32>
    %18 = arith.index_cast %c0_i32_8 : i32 to index
    %c0_12 = arith.constant 0 : index
    %c0_13 = arith.constant 0 : index
    %19 = vector.load %arg7[%18, %c0_12, %c0_13] : memref<8x8x128xf32, #tpu.memory_space<vmem>>, vector<1x8x128xf32>
    %20 = vector.shape_cast %19 : vector<1x8x128xf32> to vector<8x128xf32>
    %21 = vector.shape_cast %17 : vector<8x128xf32> to vector<1x8x128xf32>
    tpu.vector_store %arg7[%18, %c0_12, %c0_13], %21 {strides = array<i32>} : memref<8x8x128xf32, #tpu.memory_space<vmem>>, vector<1x8x128xf32>,
    %c1_i32 = arith.constant 1 : i32
    %22 = arith.index_cast %c1_i32 : i32 to index
    %c0_14 = arith.constant 0 : index
    %c0_15 = arith.constant 0 : index
    %23 = vector.load %arg2[%22, %c0_14, %c0_15] : memref<8x8x16xbf16, #tpu.memory_space<vmem>>, vector<1x8x16xbf16>
    %24 = vector.shape_cast %23 : vector<1x8x16xbf16> to vector<8x16xbf16>
    %cst_16 = arith.constant dense<0.000000e+00> : vector<8x128xf32>
    %25 = tpu.matmul %24, %3, %cst_16 {dimension_numbers = #tpu.dot_dimension_numbers<[1], [0], [0], [1], [0, 0, 1, 1], [], []>} : vector<8x16xbf16>, vector<16x128xbf16>, vector<8x128xf32> -> vector<8x128xf32>
    %26 = arith.truncf %17 : vector<8x128xf32> to vector<8x128xbf16>
    %cst_17 = arith.constant dense<0.000000e+00> : vector<8x128xf32>
    %27 = tpu.matmul %26, %4, %cst_17 {dimension_numbers = #tpu.dot_dimension_numbers<[1], [0], [0], [1], [0, 0, 1, 1], [], []>} : vector<8x128xbf16>, vector<128x128xbf16>, vector<8x128xf32> -> vector<8x128xf32>
    %28 = arith.addf %25, %27 : vector<8x128xf32>
    %29 = arith.addf %28, %7 : vector<8x128xf32>
    %30 = math.tanh %29 : vector<8x128xf32>
    %31 = arith.index_cast %c1_i32 : i32 to index
    %c0_18 = arith.constant 0 : index
    %c0_19 = arith.constant 0 : index
    %32 = vector.load %arg7[%31, %c0_18, %c0_19] : memref<8x8x128xf32, #tpu.memory_space<vmem>>, vector<1x8x128xf32>
    %33 = vector.shape_cast %32 : vector<1x8x128xf32> to vector<8x128xf32>
    %34 = vector.shape_cast %30 : vector<8x128xf32> to vector<1x8x128xf32>
    tpu.vector_store %arg7[%31, %c0_18, %c0_19], %34 {strides = array<i32>} : memref<8x8x128xf32, #tpu.memory_space<vmem>>, vector<1x8x128xf32>,
    %c2_i32 = arith.constant 2 : i32
    %35 = arith.index_cast %c2_i32 : i32 to index
    %c0_20 = arith.constant 0 : index
    %c0_21 = arith.constant 0 : index
    %36 = vector.load %arg2[%35, %c0_20, %c0_21] : memref<8x8x16xbf16, #tpu.memory_space<vmem>>, vector<1x8x16xbf16>
    %37 = vector.shape_cast %36 : vector<1x8x16xbf16> to vector<8x16xbf16>
    %cst_22 = arith.constant dense<0.000000e+00> : vector<8x128xf32>
    %38 = tpu.matmul %37, %3, %cst_22 {dimension_numbers = #tpu.dot_dimension_numbers<[1], [0], [0], [1], [0, 0, 1, 1], [], []>} : vector<8x16xbf16>, vector<16x128xbf16>, vector<8x128xf32> -> vector<8x128xf32>
    %39 = arith.truncf %30 : vector<8x128xf32> to vector<8x128xbf16>
    %cst_23 = arith.constant dense<0.000000e+00> : vector<8x128xf32>
    %40 = tpu.matmul %39, %4, %cst_23 {dimension_numbers = #tpu.dot_dimension_numbers<[1], [0], [0], [1], [0, 0, 1, 1], [], []>} : vector<8x128xbf16>, vector<128x128xbf16>, vector<8x128xf32> -> vector<8x128xf32>
    %41 = arith.addf %38, %40 : vector<8x128xf32>
    %42 = arith.addf %41, %7 : vector<8x128xf32>
    %43 = math.tanh %42 : vector<8x128xf32>
    %44 = arith.index_cast %c2_i32 : i32 to index
    %c0_24 = arith.constant 0 : index
    %c0_25 = arith.constant 0 : index
    %45 = vector.load %arg7[%44, %c0_24, %c0_25] : memref<8x8x128xf32, #tpu.memory_space<vmem>>, vector<1x8x128xf32>
    %46 = vector.shape_cast %45 : vector<1x8x128xf32> to vector<8x128xf32>
    %47 = vector.shape_cast %43 : vector<8x128xf32> to vector<1x8x128xf32>
    tpu.vector_store %arg7[%44, %c0_24, %c0_25], %47 {strides = array<i32>} : memref<8x8x128xf32, #tpu.memory_space<vmem>>, vector<1x8x128xf32>,
    %c3_i32 = arith.constant 3 : i32
    %48 = arith.index_cast %c3_i32 : i32 to index
    %c0_26 = arith.constant 0 : index
    %c0_27 = arith.constant 0 : index
    %49 = vector.load %arg2[%48, %c0_26, %c0_27] : memref<8x8x16xbf16, #tpu.memory_space<vmem>>, vector<1x8x16xbf16>
    %50 = vector.shape_cast %49 : vector<1x8x16xbf16> to vector<8x16xbf16>
    %cst_28 = arith.constant dense<0.000000e+00> : vector<8x128xf32>
    %51 = tpu.matmul %50, %3, %cst_28 {dimension_numbers = #tpu.dot_dimension_numbers<[1], [0], [0], [1], [0, 0, 1, 1], [], []>} : vector<8x16xbf16>, vector<16x128xbf16>, vector<8x128xf32> -> vector<8x128xf32>
    %52 = arith.truncf %43 : vector<8x128xf32> to vector<8x128xbf16>
    %cst_29 = arith.constant dense<0.000000e+00> : vector<8x128xf32>
    %53 = tpu.matmul %52, %4, %cst_29 {dimension_numbers = #tpu.dot_dimension_numbers<[1], [0], [0], [1], [0, 0, 1, 1], [], []>} : vector<8x128xbf16>, vector<128x128xbf16>, vector<8x128xf32> -> vector<8x128xf32>
    %54 = arith.addf %51, %53 : vector<8x128xf32>
    %55 = arith.addf %54, %7 : vector<8x128xf32>
    %56 = math.tanh %55 : vector<8x128xf32>
    %57 = arith.index_cast %c3_i32 : i32 to index
    %c0_30 = arith.constant 0 : index
    %c0_31 = arith.constant 0 : index
    %58 = vector.load %arg7[%57, %c0_30, %c0_31] : memref<8x8x128xf32, #tpu.memory_space<vmem>>, vector<1x8x128xf32>
    %59 = vector.shape_cast %58 : vector<1x8x128xf32> to vector<8x128xf32>
    %60 = vector.shape_cast %56 : vector<8x128xf32> to vector<1x8x128xf32>
    tpu.vector_store %arg7[%57, %c0_30, %c0_31], %60 {strides = array<i32>} : memref<8x8x128xf32, #tpu.memory_space<vmem>>, vector<1x8x128xf32>,
    %c4_i32 = arith.constant 4 : i32
    %61 = arith.index_cast %c4_i32 : i32 to index
    %c0_32 = arith.constant 0 : index
    %c0_33 = arith.constant 0 : index
    %62 = vector.load %arg2[%61, %c0_32, %c0_33] : memref<8x8x16xbf16, #tpu.memory_space<vmem>>, vector<1x8x16xbf16>
    %63 = vector.shape_cast %62 : vector<1x8x16xbf16> to vector<8x16xbf16>
    %cst_34 = arith.constant dense<0.000000e+00> : vector<8x128xf32>
    %64 = tpu.matmul %63, %3, %cst_34 {dimension_numbers = #tpu.dot_dimension_numbers<[1], [0], [0], [1], [0, 0, 1, 1], [], []>} : vector<8x16xbf16>, vector<16x128xbf16>, vector<8x128xf32> -> vector<8x128xf32>
    %65 = arith.truncf %56 : vector<8x128xf32> to vector<8x128xbf16>
    %cst_35 = arith.constant dense<0.000000e+00> : vector<8x128xf32>
    %66 = tpu.matmul %65, %4, %cst_35 {dimension_numbers = #tpu.dot_dimension_numbers<[1], [0], [0], [1], [0, 0, 1, 1], [], []>} : vector<8x128xbf16>, vector<128x128xbf16>, vector<8x128xf32> -> vector<8x128xf32>
    %67 = arith.addf %64, %66 : vector<8x128xf32>
    %68 = arith.addf %67, %7 : vector<8x128xf32>
    %69 = math.tanh %68 : vector<8x128xf32>
    %70 = arith.index_cast %c4_i32 : i32 to index
    %c0_36 = arith.constant 0 : index
    %c0_37 = arith.constant 0 : index
    %71 = vector.load %arg7[%70, %c0_36, %c0_37] : memref<8x8x128xf32, #tpu.memory_space<vmem>>, vector<1x8x128xf32>
    %72 = vector.shape_cast %71 : vector<1x8x128xf32> to vector<8x128xf32>
    %73 = vector.shape_cast %69 : vector<8x128xf32> to vector<1x8x128xf32>
    tpu.vector_store %arg7[%70, %c0_36, %c0_37], %73 {strides = array<i32>} : memref<8x8x128xf32, #tpu.memory_space<vmem>>, vector<1x8x128xf32>,
    %c5_i32 = arith.constant 5 : i32
    %74 = arith.index_cast %c5_i32 : i32 to index
    %c0_38 = arith.constant 0 : index
    %c0_39 = arith.constant 0 : index
    %75 = vector.load %arg2[%74, %c0_38, %c0_39] : memref<8x8x16xbf16, #tpu.memory_space<vmem>>, vector<1x8x16xbf16>
    %76 = vector.shape_cast %75 : vector<1x8x16xbf16> to vector<8x16xbf16>
    %cst_40 = arith.constant dense<0.000000e+00> : vector<8x128xf32>
    %77 = tpu.matmul %76, %3, %cst_40 {dimension_numbers = #tpu.dot_dimension_numbers<[1], [0], [0], [1], [0, 0, 1, 1], [], []>} : vector<8x16xbf16>, vector<16x128xbf16>, vector<8x128xf32> -> vector<8x128xf32>
    %78 = arith.truncf %69 : vector<8x128xf32> to vector<8x128xbf16>
    %cst_41 = arith.constant dense<0.000000e+00> : vector<8x128xf32>
    %79 = tpu.matmul %78, %4, %cst_41 {dimension_numbers = #tpu.dot_dimension_numbers<[1], [0], [0], [1], [0, 0, 1, 1], [], []>} : vector<8x128xbf16>, vector<128x128xbf16>, vector<8x128xf32> -> vector<8x128xf32>
    %80 = arith.addf %77, %79 : vector<8x128xf32>
    %81 = arith.addf %80, %7 : vector<8x128xf32>
    %82 = math.tanh %81 : vector<8x128xf32>
    %83 = arith.index_cast %c5_i32 : i32 to index
    %c0_42 = arith.constant 0 : index
    %c0_43 = arith.constant 0 : index
    %84 = vector.load %arg7[%83, %c0_42, %c0_43] : memref<8x8x128xf32, #tpu.memory_space<vmem>>, vector<1x8x128xf32>
    %85 = vector.shape_cast %84 : vector<1x8x128xf32> to vector<8x128xf32>
    %86 = vector.shape_cast %82 : vector<8x128xf32> to vector<1x8x128xf32>
    tpu.vector_store %arg7[%83, %c0_42, %c0_43], %86 {strides = array<i32>} : memref<8x8x128xf32, #tpu.memory_space<vmem>>, vector<1x8x128xf32>,
    %c6_i32 = arith.constant 6 : i32
    %87 = arith.index_cast %c6_i32 : i32 to index
    %c0_44 = arith.constant 0 : index
    %c0_45 = arith.constant 0 : index
    %88 = vector.load %arg2[%87, %c0_44, %c0_45] : memref<8x8x16xbf16, #tpu.memory_space<vmem>>, vector<1x8x16xbf16>
    %89 = vector.shape_cast %88 : vector<1x8x16xbf16> to vector<8x16xbf16>
    %cst_46 = arith.constant dense<0.000000e+00> : vector<8x128xf32>
    %90 = tpu.matmul %89, %3, %cst_46 {dimension_numbers = #tpu.dot_dimension_numbers<[1], [0], [0], [1], [0, 0, 1, 1], [], []>} : vector<8x16xbf16>, vector<16x128xbf16>, vector<8x128xf32> -> vector<8x128xf32>
    %91 = arith.truncf %82 : vector<8x128xf32> to vector<8x128xbf16>
    %cst_47 = arith.constant dense<0.000000e+00> : vector<8x128xf32>
    %92 = tpu.matmul %91, %4, %cst_47 {dimension_numbers = #tpu.dot_dimension_numbers<[1], [0], [0], [1], [0, 0, 1, 1], [], []>} : vector<8x128xbf16>, vector<128x128xbf16>, vector<8x128xf32> -> vector<8x128xf32>
    %93 = arith.addf %90, %92 : vector<8x128xf32>
    %94 = arith.addf %93, %7 : vector<8x128xf32>
    %95 = math.tanh %94 : vector<8x128xf32>
    %96 = arith.index_cast %c6_i32 : i32 to index
    %c0_48 = arith.constant 0 : index
    %c0_49 = arith.constant 0 : index
    %97 = vector.load %arg7[%96, %c0_48, %c0_49] : memref<8x8x128xf32, #tpu.memory_space<vmem>>, vector<1x8x128xf32>
    %98 = vector.shape_cast %97 : vector<1x8x128xf32> to vector<8x128xf32>
    %99 = vector.shape_cast %95 : vector<8x128xf32> to vector<1x8x128xf32>
    tpu.vector_store %arg7[%96, %c0_48, %c0_49], %99 {strides = array<i32>} : memref<8x8x128xf32, #tpu.memory_space<vmem>>, vector<1x8x128xf32>,
    %c7_i32 = arith.constant 7 : i32
    %100 = arith.index_cast %c7_i32 : i32 to index
    %c0_50 = arith.constant 0 : index
    %c0_51 = arith.constant 0 : index
    %101 = vector.load %arg2[%100, %c0_50, %c0_51] : memref<8x8x16xbf16, #tpu.memory_space<vmem>>, vector<1x8x16xbf16>
    %102 = vector.shape_cast %101 : vector<1x8x16xbf16> to vector<8x16xbf16>
    %cst_52 = arith.constant dense<0.000000e+00> : vector<8x128xf32>
    %103 = tpu.matmul %102, %3, %cst_52 {dimension_numbers = #tpu.dot_dimension_numbers<[1], [0], [0], [1], [0, 0, 1, 1], [], []>} : vector<8x16xbf16>, vector<16x128xbf16>, vector<8x128xf32> -> vector<8x128xf32>
    %104 = arith.truncf %95 : vector<8x128xf32> to vector<8x128xbf16>
    %cst_53 = arith.constant dense<0.000000e+00> : vector<8x128xf32>
    %105 = tpu.matmul %104, %4, %cst_53 {dimension_numbers = #tpu.dot_dimension_numbers<[1], [0], [0], [1], [0, 0, 1, 1], [], []>} : vector<8x128xbf16>, vector<128x128xbf16>, vector<8x128xf32> -> vector<8x128xf32>
    %106 = arith.addf %103, %105 : vector<8x128xf32>
    %107 = arith.addf %106, %7 : vector<8x128xf32>
    %108 = math.tanh %107 : vector<8x128xf32>
    %109 = arith.index_cast %c7_i32 : i32 to index
    %c0_54 = arith.constant 0 : index
    %c0_55 = arith.constant 0 : index
    %110 = vector.load %arg7[%109, %c0_54, %c0_55] : memref<8x8x128xf32, #tpu.memory_space<vmem>>, vector<1x8x128xf32>
    %111 = vector.shape_cast %110 : vector<1x8x128xf32> to vector<8x128xf32>
    %112 = vector.shape_cast %108 : vector<8x128xf32> to vector<1x8x128xf32>
    tpu.vector_store %arg7[%109, %c0_54, %c0_55], %112 {strides = array<i32>} : memref<8x8x128xf32, #tpu.memory_space<vmem>>, vector<1x8x128xf32>,
    %c8_i32 = arith.constant 8 : i32
    %c0_56 = arith.constant 0 : index
    %c0_57 = arith.constant 0 : index
    %113 = vector.load %arg8[%c0_56, %c0_57] : memref<8x128xf32, #tpu.memory_space<vmem>>, vector<8x128xf32>
    tpu.vector_store %arg8[%c0_56, %c0_57], %108 {strides = array<i32>} : memref<8x128xf32, #tpu.memory_space<vmem>>, vector<8x128xf32>,
    return
  }
  func.func @transform_0(%arg0: i32, %arg1: i32) -> (i32, i32, i32) {
    %c0_i32 = arith.constant 0 : i32
    %c0_i32_0 = arith.constant 0 : i32
    return %arg1, %arg0, %c0_i32 : i32, i32, i32
  }
  func.func @transform_1(%arg0: i32, %arg1: i32) -> (i32, i32) {
    %c0_i32 = arith.constant 0 : i32
    %c0_i32_0 = arith.constant 0 : i32
    return %arg0, %c0_i32 : i32, i32
  }
  func.func @transform_2(%arg0: i32, %arg1: i32) -> (i32, i32) {
    %c0_i32 = arith.constant 0 : i32
    %c0_i32_0 = arith.constant 0 : i32
    %c0_i32_1 = arith.constant 0 : i32
    return %c0_i32, %c0_i32_0 : i32, i32
  }
  func.func @transform_3(%arg0: i32, %arg1: i32) -> (i32, i32) {
    %c0_i32 = arith.constant 0 : i32
    %c0_i32_0 = arith.constant 0 : i32
    %c0_i32_1 = arith.constant 0 : i32
    return %c0_i32, %c0_i32_0 : i32, i32
  }
  func.func @transform_4(%arg0: i32, %arg1: i32) -> (i32, i32) {
    %c0_i32 = arith.constant 0 : i32
    %c0_i32_0 = arith.constant 0 : i32
    %c0_i32_1 = arith.constant 0 : i32
    return %c0_i32, %c0_i32_0 : i32, i32
  }
  func.func @transform_5(%arg0: i32, %arg1: i32) -> (i32, i32, i32) {
    %c0_i32 = arith.constant 0 : i32
    %c0_i32_0 = arith.constant 0 : i32
    return %arg1, %arg0, %c0_i32 : i32, i32, i32
  }
}

</mosaic_0001>

<llo_original>
// kernel: tpu_custom_call.1
$region0: #{tpu_custom_call.1}
  #allocation0 [shape = 'u32[]', space=smem, size = 0x4, offset = 0x4, fixed_abs, tag = 'smem constant byte address 0x4 - core index']
  #allocation1 [shape = 'u32[72,128]{1,0:T(1,128)}', space=vmem, size = 0x9000, scoped, tag = 'internal scratch']
  #allocation2 [shape = 'f32[8,128]{1,0:T(8,128)}', space=vmem, size = 0x1000, scoped, tag = 'scratch operand']
  %s0 = inlined_call_operand.hbm [shape: bf16[16,8,16], index: 0, kind: input, shape index: {}]
  %s1 = inlined_call_operand.hbm [shape: f32[8,128], index: 1, kind: input, shape index: {}]
  %s2 = inlined_call_operand.hbm [shape: bf16[16,128], index: 2, kind: input, shape index: {}]
  %s3 = inlined_call_operand.hbm [shape: bf16[128,128], index: 3, kind: input, shape index: {}]
  %s4 = inlined_call_operand.vmem [shape: f32[1,128], index: 4, kind: input, shape index: {}]
  %s5 = inlined_call_operand.hbm [shape: f32[16,8,128], index: 5, kind: output, shape index: {}]
  %s6 = sld [smem:[#allocation0]]
  $region73: #{tpu_custom_call.1} parent=0
    _
  %s8 = ssub.s32 1, %s6
  %s9 = scalar_select 0, %s8, %s6
  $region1: #{tpu_custom_call.1} parent=0
    #allocation3 [shape = 'u8[32768]{0}', space=vmem, size = 0x8000, scoped, tag = 'input window, operand 0']
    #allocation4 [shape = 's32[2]{0}', space=sflag, size = 0x8, scoped, tag = 'scoped memory for tpu_custom_call.1']
    #allocation5 [shape = 's32[2]{0}', space=sflag, size = 0x8, scoped, tag = 'scoped memory for tpu_custom_call.1']
    #allocation6 [shape = 'u8[4096]{0}', space=vmem, size = 0x1000, scoped, tag = 'input window, operand 1, single buffered']
    #allocation7 [shape = 's32[1]{0}', space=sflag, size = 0x4, scoped, tag = 'scoped memory for tpu_custom_call.1']
    #allocation8 [shape = 'u8[4096]{0}', space=vmem, size = 0x1000, scoped, tag = 'input window, operand 2, single buffered']
    #allocation9 [shape = 'u8[32768]{0}', space=vmem, size = 0x8000, scoped, tag = 'input window, operand 3, single buffered']
    #allocation10 [shape = 's32[1]{0}', space=sflag, size = 0x4, scoped, tag = 'scoped memory for tpu_custom_call.1']
    #allocation11 [shape = 'u8[65536]{0}', space=vmem, size = 0x10000, scoped, tag = 'output window, operand 0']
    %10 = vsyncpa [#allocation4], 0
    %s11 = scalar_lea.sflag [#allocation4], 1
    %12 = vsyncpa %s11, 0
    %13 = vsyncpa [#allocation7], 0
    %14 = vsyncpa [#allocation10], 0
    %15 = vsyncpa [#allocation5], 0
    %s16 = scalar_lea.sflag [#allocation5], 1
    %17 = vsyncpa %s16, 0
    loop: start=0, step=1, limit=4
    $region2: #{tpu_custom_call.1} parent=1 // loop_pre_header
      _
    $region3: #{tpu_custom_call.1} parent=1 // loop_header
      %s19 = sphi 0, %s23
      %p20 = scmp.ge.s32.totalorder %s19, 4
      %s26 = sphi 0, %s38
      %s27 = sphi 0, %s34
      %s28 = sphi 0, %s26
      %s29 = sphi 0, %s27
      %s30 = sphi 0, %s28
      %s31 = sphi 0, %s29
      %s43 = sphi 0, %s45
      %s46 = sphi 0, %s43
      %s47 = sphi 0, %s46
      %s63 = sphi 0, %s47
      %s69 = sphi 0, %s71
      %s72 = sphi 0, %s69
      %s73 = sphi 0, %s72
      %s89 = sphi 0, %s73
      %s93 = sphi 0, %s93
      %s95 = sphi 0, %s93
      %s96 = sphi 0, %s95
      %s110 = sphi 0, %s96
      %s114 = sphi 0, %s114
      %s116 = sphi 0, %s114
      %s117 = sphi 0, %s116
      %s131 = sphi 0, %s117
      %s135 = sphi 0, %s135
      %s137 = sphi 0, %s135
      %s138 = sphi 0, %s137
      %s152 = sphi 0, %s138
      %s160 = sphi 0, %s162
      %s163 = sphi 0, %s160
      %s164 = sphi 0, %s163
      %s180 = sphi 0, %s164
    $region4: #{tpu_custom_call.1} parent=1 // loop_header_branch
      %22 = sbr.rel (%p20) target = $region8
    $region5: #{tpu_custom_call.1} parent=1 // loop_body
      %s24 = ssub.s32 %s19, 1
      %s25 = ssub.s32 %s19, 2
      %s32 = sadd.s32 1, %s27
      %p33 = scmp.ge.s32.totalorder %s32, 2
      %s34 = scalar_select %p33, 0, %s32
      %s35 = sadd.s32 1, %s26
      %s36 = scalar_select %p33, %s35, %s26
      %p37 = scmp.ge.s32.totalorder %s36, 1
      %s38 = scalar_select %p37, 0, %s36
      %s39 = ssub.s32 %s27, %s34
      %s40 = ssub.s32 %s26, %s38
      %s41 = sor.u32 %s39, %s40
      %p42 = scmp.eq.s32.totalorder %s41, 0
      %s44 = sadd.s32 %s43, 1
      %s45 = scalar_select %p42, %s43, %s44
      %p48 = pneg %p42
      %p49 = scmp.eq.s32.totalorder %s19, 1
      %p50 = por %p48, %p49
      %p51 = scmp.ne.s32.totalorder %s43, %s46
      %p52 = scmp.eq.s32.totalorder %s19, 0
      %p53 = por %p51, %p52
      %p54 = scmp.ne.s32.totalorder %s43, %s46
      %p55 = scmp.eq.s32.totalorder %s24, 1
      %p56 = por %p54, %p55
      %p57 = scmp.ne.s32.totalorder %s46, %s47
      %p58 = scmp.eq.s32.totalorder %s24, 0
      %p59 = por %p57, %p58
      %p60 = scmp.ne.s32.totalorder %s46, %s47
      %p61 = scmp.eq.s32.totalorder %s25, 1
      %p62 = por %p60, %p61
      %p64 = scmp.ne.s32.totalorder %s47, %s63
      %p65 = scmp.eq.s32.totalorder %s25, 0
      %p66 = por %p64, %p65
      %s67 = ssub.s32 %s26, %s38
      %p68 = scmp.eq.s32.totalorder %s67, 0
      %s70 = sadd.s32 %s69, 1
      %s71 = scalar_select %p68, %s69, %s70
      %p74 = pneg %p68
      %p75 = scmp.eq.s32.totalorder %s19, 1
      %p76 = por %p74, %p75
      %p77 = scmp.ne.s32.totalorder %s69, %s72
      %p78 = scmp.eq.s32.totalorder %s19, 0
      %p79 = por %p77, %p78
      %p80 = scmp.ne.s32.totalorder %s69, %s72
      %p81 = scmp.eq.s32.totalorder %s24, 1
      %p82 = por %p80, %p81
      %p83 = scmp.ne.s32.totalorder %s72, %s73
      %p84 = scmp.eq.s32.totalorder %s24, 0
      %p85 = por %p83, %p84
      %p86 = scmp.ne.s32.totalorder %s72, %s73
      %p87 = scmp.eq.s32.totalorder %s25, 1
      %p88 = por %p86, %p87
      %p90 = scmp.ne.s32.totalorder %s73, %s89
      %p91 = scmp.eq.s32.totalorder %s25, 0
      %p92 = por %p90, %p91
      %s94 = sadd.s32 %s93, 1
      %p97 = scmp.eq.s32.totalorder %s19, 1
      %p98 = scmp.ne.s32.totalorder %s93, %s95
      %p99 = scmp.eq.s32.totalorder %s19, 0
      %p100 = por %p98, %p99
      %p101 = scmp.ne.s32.totalorder %s93, %s95
      %p102 = scmp.eq.s32.totalorder %s24, 1
      %p103 = por %p101, %p102
      %p104 = scmp.ne.s32.totalorder %s95, %s96
      %p105 = scmp.eq.s32.totalorder %s24, 0
      %p106 = por %p104, %p105
      %p107 = scmp.ne.s32.totalorder %s95, %s96
      %p108 = scmp.eq.s32.totalorder %s25, 1
      %p109 = por %p107, %p108
      %p111 = scmp.ne.s32.totalorder %s96, %s110
      %p112 = scmp.eq.s32.totalorder %s25, 0
      %p113 = por %p111, %p112
      %s115 = sadd.s32 %s114, 1
      %p118 = scmp.eq.s32.totalorder %s19, 1
      %p119 = scmp.ne.s32.totalorder %s114, %s116
      %p120 = scmp.eq.s32.totalorder %s19, 0
      %p121 = por %p119, %p120
      %p122 = scmp.ne.s32.totalorder %s114, %s116
      %p123 = scmp.eq.s32.totalorder %s24, 1
      %p124 = por %p122, %p123
      %p125 = scmp.ne.s32.totalorder %s116, %s117
      %p126 = scmp.eq.s32.totalorder %s24, 0
      %p127 = por %p125, %p126
      %p128 = scmp.ne.s32.totalorder %s116, %s117
      %p129 = scmp.eq.s32.totalorder %s25, 1
      %p130 = por %p128, %p129
      %p132 = scmp.ne.s32.totalorder %s117, %s131
      %p133 = scmp.eq.s32.totalorder %s25, 0
      %p134 = por %p132, %p133
      %s136 = sadd.s32 %s135, 1
      %p139 = scmp.eq.s32.totalorder %s19, 1
      %p140 = scmp.ne.s32.totalorder %s135, %s137
      %p141 = scmp.eq.s32.totalorder %s19, 0
      %p142 = por %p140, %p141
      %p143 = scmp.ne.s32.totalorder %s135, %s137
      %p144 = scmp.eq.s32.totalorder %s24, 1
      %p145 = por %p143, %p144
      %p146 = scmp.ne.s32.totalorder %s137, %s138
      %p147 = scmp.eq.s32.totalorder %s24, 0
      %p148 = por %p146, %p147
      %p149 = scmp.ne.s32.totalorder %s137, %s138
      %p150 = scmp.eq.s32.totalorder %s25, 1
      %p151 = por %p149, %p150
      %p153 = scmp.ne.s32.totalorder %s138, %s152
      %p154 = scmp.eq.s32.totalorder %s25, 0
      %p155 = por %p153, %p154
      %s156 = ssub.s32 %s27, %s34
      %s157 = ssub.s32 %s26, %s38
      %s158 = sor.u32 %s156, %s157
      %p159 = scmp.eq.s32.totalorder %s158, 0
      %s161 = sadd.s32 %s160, 1
      %s162 = scalar_select %p159, %s160, %s161
      %p165 = pneg %p159
      %p166 = scmp.eq.s32.totalorder %s19, 1
      %p167 = por %p165, %p166
      %p168 = scmp.ne.s32.totalorder %s160, %s163
      %p169 = scmp.eq.s32.totalorder %s19, 0
      %p170 = por %p168, %p169
      %p171 = scmp.ne.s32.totalorder %s160, %s163
      %p172 = scmp.eq.s32.totalorder %s24, 1
      %p173 = por %p171, %p172
      %p174 = scmp.ne.s32.totalorder %s163, %s164
      %p175 = scmp.eq.s32.totalorder %s24, 0
      %p176 = por %p174, %p175
      %p177 = scmp.ne.s32.totalorder %s163, %s164
      %p178 = scmp.eq.s32.totalorder %s25, 1
      %p179 = por %p177, %p178
      %p181 = scmp.ne.s32.totalorder %s164, %s180
      %p182 = scmp.eq.s32.totalorder %s25, 0
      %p183 = por %p181, %p182
      %p184 = scmp.le.s32.totalorder 1, %s19
      %p185 = scmp.lt.s32.totalorder %s19, 3
      %p186 = pnand %p184, %p185
      %p187 = pneg %p186
      // Predicated region
      $region9: #{tpu_custom_call.1} parent=5 // pred_check
        _
      $region10: #{tpu_custom_call.1} parent=5 // pred_check_branch
        %189 = sbr.rel (%p186) target = $region12
      $region11: #{tpu_custom_call.1} parent=5 // pred_region
        %s190 = ssub.s32 %s19, 1
        // Predicated region
        $region13: #{tpu_custom_call.1} parent=11 // pred_check
          %p191 = pneg %p85
        $region14: #{tpu_custom_call.1} parent=11 // pred_check_branch
          %193 = sbr.rel (%p191) target = $region16
        $region15: #{tpu_custom_call.1} parent=11 // pred_region
          %195 = vsyncadd [#allocation7], 0
          %s196 = smul.addr %s28, 8
          %s197 = scalar_lea.hbm %s1, %s196
          %s199 = sshll.u32 %s197, 4
          %s200 = int_to_ptr.hbm [resolvable:$true] %s199
          %s201 = sshll.u32 [#allocation6], 4
          %s202 = int_to_ptr.vmem [resolvable:$true] %s201
          %204 = dma.hbm_to_vmem [thread:$0]  %s200, 128, %s202, [#allocation7]
        $region16: #{tpu_custom_call.1} parent=11 // pred_fallthru
          _
        // Predicated region
        $region17: #{tpu_custom_call.1} parent=11 // pred_check
          %p205 = pneg %p106
        $region18: #{tpu_custom_call.1} parent=11 // pred_check_branch
          %207 = sbr.rel (%p205) target = $region20
        $region19: #{tpu_custom_call.1} parent=11 // pred_region
          %209 = vsyncadd [#allocation7], 0
          %s210 = sshll.u32 %s2, 4
          %s211 = int_to_ptr.hbm [resolvable:$true] %s210
          %s212 = sshll.u32 [#allocation8], 4
          %s213 = int_to_ptr.vmem [resolvable:$true] %s212
          %218 = dma.hbm_to_vmem [thread:$0]  %s211, 128, %s213, [#allocation7], 64, 64, 4
        $region20: #{tpu_custom_call.1} parent=11 // pred_fallthru
          _
        // Predicated region
        $region21: #{tpu_custom_call.1} parent=11 // pred_check
          %p219 = pneg %p127
        $region22: #{tpu_custom_call.1} parent=11 // pred_check_branch
          %221 = sbr.rel (%p219) target = $region24
        $region23: #{tpu_custom_call.1} parent=11 // pred_region
          %223 = vsyncadd [#allocation10], 0
          %s224 = sshll.u32 %s3, 4
          %s225 = int_to_ptr.hbm [resolvable:$true] %s224
          %s226 = sshll.u32 [#allocation9], 4
          %s227 = int_to_ptr.vmem [resolvable:$true] %s226
          %232 = dma.hbm_to_vmem [thread:$0]  %s225, 1024, %s227, [#allocation10], 64, 64, 4
        $region24: #{tpu_custom_call.1} parent=11 // pred_fallthru
          _
        // Predicated region
        $region25: #{tpu_custom_call.1} parent=11 // pred_check
          %p233 = pneg %p148
        $region26: #{tpu_custom_call.1} parent=11 // pred_check_branch
          %235 = sbr.rel (%p233) target = $region28
        $region27: #{tpu_custom_call.1} parent=11 // pred_region
          _
        $region28: #{tpu_custom_call.1} parent=11 // pred_fallthru
          _
      $region12: #{tpu_custom_call.1} parent=5 // pred_fallthru
        _
      %p236 = scmp.lt.s32.totalorder %s19, 2
      // Predicated region
      $region29: #{tpu_custom_call.1} parent=5 // pred_check
        %p237 = pneg %p236
      $region30: #{tpu_custom_call.1} parent=5 // pred_check_branch
        %239 = sbr.rel (%p237) target = $region32
      $region31: #{tpu_custom_call.1} parent=5 // pred_region
        // Predicated region
        $region33: #{tpu_custom_call.1} parent=31 // pred_check
          %p240 = pneg %p53
        $region34: #{tpu_custom_call.1} parent=31 // pred_check_branch
          %242 = sbr.rel (%p240) target = $region36
        $region35: #{tpu_custom_call.1} parent=31 // pred_region
          %s243 = sand.u32 %s43, 1
          %s244 = scalar_lea.sflag [#allocation4], %s243
          %s245 = sand.u32 %s43, 1
          %s246 = smul.addr %s245, 32
          %s247 = scalar_lea.vmem [#allocation3], %s246
          %s248 = smul.u32 8, %s27
          %250 = vsyncadd %s244, 0
          %s251 = sadd.s32 %s26, %s248
          %s252 = smul.addr %s251, 4
          %s253 = scalar_lea.hbm %s0, %s252
          %s254 = sshll.u32 %s253, 4
          %s255 = int_to_ptr.hbm [resolvable:$true] %s254
          %s256 = sshll.u32 %s247, 4
          %s257 = int_to_ptr.vmem [resolvable:$true] %s256
          %262 = dma.hbm_to_vmem [thread:$0]  %s255, 512, %s257, %s244, 64, 64, 4
        $region36: #{tpu_custom_call.1} parent=31 // pred_fallthru
          _
      $region32: #{tpu_custom_call.1} parent=5 // pred_fallthru
        _
      %p263 = scmp.le.s32.totalorder 1, %s19
      %p264 = scmp.lt.s32.totalorder %s19, 3
      %p265 = pnand %p263, %p264
      %p266 = pneg %p265
      // Predicated region
      $region37: #{tpu_custom_call.1} parent=5 // pred_check
        _
      $region38: #{tpu_custom_call.1} parent=5 // pred_check_branch
        %268 = sbr.rel (%p265) target = $region40
      $region39: #{tpu_custom_call.1} parent=5 // pred_region
        %s269 = ssub.s32 %s19, 1
        %s270 = sand.u32 %s46, 1
        %s271 = scalar_lea.sflag [#allocation4], %s270
        %s272 = sand.u32 %s46, 1
        %s273 = smul.addr %s272, 32
        %s274 = scalar_lea.vmem [#allocation3], %s273
        // Predicated region
        $region41: #{tpu_custom_call.1} parent=39 // pred_check
          %p275 = pneg %p59
        $region42: #{tpu_custom_call.1} parent=39 // pred_check_branch
          %277 = sbr.rel (%p275) target = $region44
        $region43: #{tpu_custom_call.1} parent=39 // pred_region
          %279 = dma.done %s271, 512
        $region44: #{tpu_custom_call.1} parent=39 // pred_fallthru
          _
        // Predicated region
        $region45: #{tpu_custom_call.1} parent=39 // pred_check
          %p280 = pneg %p85
        $region46: #{tpu_custom_call.1} parent=39 // pred_check_branch
          %282 = sbr.rel (%p280) target = $region48
        $region47: #{tpu_custom_call.1} parent=39 // pred_region
          %284 = dma.done [#allocation7], 128
        $region48: #{tpu_custom_call.1} parent=39 // pred_fallthru
          _
        // Predicated region
        $region49: #{tpu_custom_call.1} parent=39 // pred_check
          %p285 = pneg %p106
        $region50: #{tpu_custom_call.1} parent=39 // pred_check_branch
          %287 = sbr.rel (%p285) target = $region52
        $region51: #{tpu_custom_call.1} parent=39 // pred_region
          %289 = dma.done [#allocation7], 128
        $region52: #{tpu_custom_call.1} parent=39 // pred_fallthru
          _
        // Predicated region
        $region53: #{tpu_custom_call.1} parent=39 // pred_check
          %p290 = pneg %p127
        $region54: #{tpu_custom_call.1} parent=39 // pred_check_branch
          %292 = sbr.rel (%p290) target = $region56
        $region55: #{tpu_custom_call.1} parent=39 // pred_region
          %294 = dma.done [#allocation10], 1024
        $region56: #{tpu_custom_call.1} parent=39 // pred_fallthru
          _
        %s295 = sand.u32 %s46, 1
        %s296 = scalar_lea.sflag [#allocation4], %s295
        %s297 = sand.u32 %s46, 1
        %s298 = smul.addr %s297, 32
        %s299 = scalar_lea.vmem [#allocation3], %s298
        %p300 = pneg %p59
        %p301 = pneg %p56
        %p302 = pneg %p85
        %p303 = pneg %p82
        %p304 = pneg %p106
        %p305 = pneg %p103
        %p306 = pneg %p127
        %p307 = pneg %p124
        %p308 = pneg %p148
        %p309 = pneg %p145
        %p310 = pneg %p176
        %p311 = pneg %p173
        %s312 = sand.u32 %s163, 1
        %s313 = scalar_lea.sflag [#allocation5], %s312
        %s314 = sand.u32 %s163, 1
        %s315 = smul.addr %s314, 64
        %s316 = scalar_lea.vmem [#allocation11], %s315
        %s317 = smul.u32 8, %s29
        %s318 = smul.u32 8, %s29
        %p320 = scmp.eq.s32.totalorder %s29, 0
        // Predicated region
        $region57: #{tpu_custom_call.1} parent=39 // pred_check
          %p321 = pneg %p320
        $region58: #{tpu_custom_call.1} parent=39 // pred_check_branch
          %323 = sbr.rel (%p321) target = $region60
        $region59: #{tpu_custom_call.1} parent=39 // pred_region
          %v324 = vld [vmem:[#allocation6] sm:$0xff]
          %325 = vst [vmem:[#allocation2] sm:$0xff] %v324
        $region60: #{tpu_custom_call.1} parent=39 // pred_fallthru
          _
        %v326 = vld [vmem:[#allocation8] sm:$0xf]
        %v327 = vld [vmem:[#allocation8 + $0x4] sm:$0xf]
        %v328 = vld [vmem:[#allocation9] sm:$0xf]
        %v329 = vld [vmem:[#allocation9 + $0x4] sm:$0xf]
        %v330 = vld [vmem:[#allocation9 + $0x8] sm:$0xf]
        %v331 = vld [vmem:[#allocation9 + $0xc] sm:$0xf]
        %v332 = vld [vmem:[#allocation9 + $0x10] sm:$0xf]
        %v333 = vld [vmem:[#allocation9 + $0x14] sm:$0xf]
        %v334 = vld [vmem:[#allocation9 + $0x18] sm:$0xf]
        %v335 = vld [vmem:[#allocation9 + $0x1c] sm:$0xf]
        %v336 = vld [vmem:[#allocation9 + $0x20] sm:$0xf]
        %v337 = vld [vmem:[#allocation9 + $0x24] sm:$0xf]
        %v338 = vld [vmem:[#allocation9 + $0x28] sm:$0xf]
        %v339 = vld [vmem:[#allocation9 + $0x2c] sm:$0xf]
        %v340 = vld [vmem:[#allocation9 + $0x30] sm:$0xf]
        %v341 = vld [vmem:[#allocation9 + $0x34] sm:$0xf]
        %v342 = vld [vmem:[#allocation9 + $0x38] sm:$0xf]
        %v343 = vld [vmem:[#allocation9 + $0x3c] sm:$0xf]
        %v344 = vld [vmem:[%s4] sm:$0x1]
        %v346 = vperm.slane %v344, 0
        %v348 = vld [vmem:[#allocation2] sm:$0xff]
        %v349 = vld [vmem:[%s274] sm:$0xf]
        %v350 = vpack.c.bf16 %v348, %v348
        %v367 = vunpack.c.l.b16 %v328
        %v368 = vunpack.c.l.b16 %v329
        %v369 = vunpack.c.l.b16 %v330
        %v370 = vunpack.c.l.b16 %v331
        %v371 = vunpack.c.l.b16 %v332
        %v372 = vunpack.c.l.b16 %v333
        %v373 = vunpack.c.l.b16 %v334
        %v374 = vunpack.c.l.b16 %v335
        %v375 = vunpack.c.l.b16 %v336
        %v376 = vunpack.c.l.b16 %v337
        %v377 = vunpack.c.l.b16 %v338
        %v378 = vunpack.c.l.b16 %v339
        %v379 = vunpack.c.l.b16 %v340
        %v380 = vunpack.c.l.b16 %v341
        %v381 = vunpack.c.l.b16 %v342
        %v382 = vunpack.c.l.b16 %v343
        %v383 = vpack.c.b16 %v368, %v367
        %v384 = vpack.c.b16 %v370, %v369
        %v385 = vpack.c.b16 %v372, %v371
        %v386 = vpack.c.b16 %v374, %v373
        %v387 = vpack.c.b16 %v376, %v375
        %v388 = vpack.c.b16 %v378, %v377
        %v389 = vpack.c.b16 %v380, %v379
        %v390 = vpack.c.b16 %v382, %v381
        %399 = vmatpush.bf16.msra.mxu0 %v390
        %400 = vmatpush.bf16.msra.mxu0 %v389
        %401 = vmatpush.bf16.msra.mxu0 %v388
        %402 = vmatpush.bf16.msra.mxu0 %v387
        %403 = vmatpush.bf16.msra.mxu0 %v386
        %404 = vmatpush.bf16.msra.mxu0 %v385
        %405 = vmatpush.bf16.msra.mxu0 %v384
        %406 = vmatpush.bf16.msra.mxu0 %v383
        %407 = vmatmul.bf16.gmra.mxu0 %v350
        %v408 = vpop.f32.mrf.mxu0
        %v409 = vadd.f32 0.0, %v408
        %v410 = vpop.f32.mrf.mxu0
        %411 = vdwg.mxu0
        %v414 = vunpack.c.l.b16 %v326
        %v415 = vunpack.c.l.b16 %v327
        %v416 = vpack.c.b16 %v415, %v414
        %vm418 = vcmask 130048
        %v420 = vsel %vm418, %v349, 0
        %422 = vmatpush.bf16.msra.mxu0 0
        %423 = vmatpush.bf16.msra.mxu0 0
        %424 = vmatpush.bf16.msra.mxu0 0
        %425 = vmatpush.bf16.msra.mxu0 0
        %426 = vmatpush.bf16.msra.mxu0 0
        %427 = vmatpush.bf16.msra.mxu0 0
        %428 = vmatpush.bf16.msra.mxu0 0
        %429 = vmatpush.bf16.msra.mxu0 %v416
        %430 = vmatmul.bf16.gmra.mxu0 %v420
        %v431 = vpop.f32.mrf.mxu0
        %v432 = vadd.f32 %v409, %v431
        %v433 = vpop.f32.mrf.mxu0
        %434 = vdwg.mxu0
        %v435 = vadd.f32 %v432, %v346
        %v436 = vtanh.pop %v435
        %437 = vst [vmem:[%s316] sm:$0xff] %v436
        %s438 = scalar_lea.vmem %s274, 4 [#allocation3]
        %v439 = vld [vmem:[%s438] sm:$0xf]
        %v440 = vpack.c.bf16 %v436, %v436
        %441 = vmatpush.bf16.msra.mxu0 %v390
        %442 = vmatpush.bf16.msra.mxu0 %v389
        %443 = vmatpush.bf16.msra.mxu0 %v388
        %444 = vmatpush.bf16.msra.mxu0 %v387
        %445 = vmatpush.bf16.msra.mxu0 %v386
        %446 = vmatpush.bf16.msra.mxu0 %v385
        %447 = vmatpush.bf16.msra.mxu0 %v384
        %448 = vmatpush.bf16.msra.mxu0 %v383
        %449 = vmatmul.bf16.gmra.mxu0 %v440
        %v450 = vpop.f32.mrf.mxu0
        %v451 = vadd.f32 0.0, %v450
        %v452 = vpop.f32.mrf.mxu0
        %453 = vdwg.mxu0
        %v455 = vsel %vm418, %v439, 0
        %457 = vmatpush.bf16.msra.mxu0 0
        %458 = vmatpush.bf16.msra.mxu0 0
        %459 = vmatpush.bf16.msra.mxu0 0
        %460 = vmatpush.bf16.msra.mxu0 0
        %461 = vmatpush.bf16.msra.mxu0 0
        %462 = vmatpush.bf16.msra.mxu0 0
        %463 = vmatpush.bf16.msra.mxu0 0
        %464 = vmatpush.bf16.msra.mxu0 %v416
        %465 = vmatmul.bf16.gmra.mxu0 %v455
        %v466 = vpop.f32.mrf.mxu0
        %v467 = vadd.f32 %v451, %v466
        %v468 = vpop.f32.mrf.mxu0
        %469 = vdwg.mxu0
        %v470 = vadd.f32 %v467, %v346
        %v471 = vtanh.pop %v470
        %s472 = scalar_lea.vmem %s316, 8 [#allocation11]
        %473 = vst [vmem:[%s472] sm:$0xff] %v471
        %s474 = scalar_lea.vmem %s274, 8 [#allocation3]
        %v475 = vld [vmem:[%s474] sm:$0xf]
        %v476 = vpack.c.bf16 %v471, %v471
        %477 = vmatpush.bf16.msra.mxu0 %v390
        %478 = vmatpush.bf16.msra.mxu0 %v389
        %479 = vmatpush.bf16.msra.mxu0 %v388
        %480 = vmatpush.bf16.msra.mxu0 %v387
        %481 = vmatpush.bf16.msra.mxu0 %v386
        %482 = vmatpush.bf16.msra.mxu0 %v385
        %483 = vmatpush.bf16.msra.mxu0 %v384
        %484 = vmatpush.bf16.msra.mxu0 %v383
        %485 = vmatmul.bf16.gmra.mxu0 %v476
        %v486 = vpop.f32.mrf.mxu0
        %v487 = vadd.f32 0.0, %v486
        %v488 = vpop.f32.mrf.mxu0
        %489 = vdwg.mxu0
        %v491 = vsel %vm418, %v475, 0
        %493 = vmatpush.bf16.msra.mxu0 0
        %494 = vmatpush.bf16.msra.mxu0 0
        %495 = vmatpush.bf16.msra.mxu0 0
        %496 = vmatpush.bf16.msra.mxu0 0
        %497 = vmatpush.bf16.msra.mxu0 0
        %498 = vmatpush.bf16.msra.mxu0 0
        %499 = vmatpush.bf16.msra.mxu0 0
        %500 = vmatpush.bf16.msra.mxu0 %v416
        %501 = vmatmul.bf16.gmra.mxu0 %v491
        %v502 = vpop.f32.mrf.mxu0
        %v503 = vadd.f32 %v487, %v502
        %v504 = vpop.f32.mrf.mxu0
        %505 = vdwg.mxu0
        %v506 = vadd.f32 %v503, %v346
        %v507 = vtanh.pop %v506
        %s508 = scalar_lea.vmem %s316, 16 [#allocation11]
        %509 = vst [vmem:[%s508] sm:$0xff] %v507
        %s510 = scalar_lea.vmem %s274, 12 [#allocation3]
        %v511 = vld [vmem:[%s510] sm:$0xf]
        %v512 = vpack.c.bf16 %v507, %v507
        %513 = vmatpush.bf16.msra.mxu0 %v390
        %514 = vmatpush.bf16.msra.mxu0 %v389
        %515 = vmatpush.bf16.msra.mxu0 %v388
        %516 = vmatpush.bf16.msra.mxu0 %v387
        %517 = vmatpush.bf16.msra.mxu0 %v386
        %518 = vmatpush.bf16.msra.mxu0 %v385
        %519 = vmatpush.bf16.msra.mxu0 %v384
        %520 = vmatpush.bf16.msra.mxu0 %v383
        %521 = vmatmul.bf16.gmra.mxu0 %v512
        %v522 = vpop.f32.mrf.mxu0
        %v523 = vadd.f32 0.0, %v522
        %v524 = vpop.f32.mrf.mxu0
        %525 = vdwg.mxu0
        %v527 = vsel %vm418, %v511, 0
        %529 = vmatpush.bf16.msra.mxu0 0
        %530 = vmatpush.bf16.msra.mxu0 0
        %531 = vmatpush.bf16.msra.mxu0 0
        %532 = vmatpush.bf16.msra.mxu0 0
        %533 = vmatpush.bf16.msra.mxu0 0
        %534 = vmatpush.bf16.msra.mxu0 0
        %535 = vmatpush.bf16.msra.mxu0 0
        %536 = vmatpush.bf16.msra.mxu0 %v416
        %537 = vmatmul.bf16.gmra.mxu0 %v527
        %v538 = vpop.f32.mrf.mxu0
        %v539 = vadd.f32 %v523, %v538
        %v540 = vpop.f32.mrf.mxu0
        %541 = vdwg.mxu0
        %v542 = vadd.f32 %v539, %v346
        %v543 = vtanh.pop %v542
        %s544 = scalar_lea.vmem %s316, 24 [#allocation11]
        %545 = vst [vmem:[%s544] sm:$0xff] %v543
        %s546 = scalar_lea.vmem %s274, 16 [#allocation3]
        %v547 = vld [vmem:[%s546] sm:$0xf]
        %v548 = vpack.c.bf16 %v543, %v543
        %549 = vmatpush.bf16.msra.mxu0 %v390
        %550 = vmatpush.bf16.msra.mxu0 %v389
        %551 = vmatpush.bf16.msra.mxu0 %v388
        %552 = vmatpush.bf16.msra.mxu0 %v387
        %553 = vmatpush.bf16.msra.mxu0 %v386
        %554 = vmatpush.bf16.msra.mxu0 %v385
        %555 = vmatpush.bf16.msra.mxu0 %v384
        %556 = vmatpush.bf16.msra.mxu0 %v383
        %557 = vmatmul.bf16.gmra.mxu0 %v548
        %v558 = vpop.f32.mrf.mxu0
        %v559 = vadd.f32 0.0, %v558
        %v560 = vpop.f32.mrf.mxu0
        %561 = vdwg.mxu0
        %v563 = vsel %vm418, %v547, 0
        %565 = vmatpush.bf16.msra.mxu0 0
        %566 = vmatpush.bf16.msra.mxu0 0
        %567 = vmatpush.bf16.msra.mxu0 0
        %568 = vmatpush.bf16.msra.mxu0 0
        %569 = vmatpush.bf16.msra.mxu0 0
        %570 = vmatpush.bf16.msra.mxu0 0
        %571 = vmatpush.bf16.msra.mxu0 0
        %572 = vmatpush.bf16.msra.mxu0 %v416
        %573 = vmatmul.bf16.gmra.mxu0 %v563
        %v574 = vpop.f32.mrf.mxu0
        %v575 = vadd.f32 %v559, %v574
        %v576 = vpop.f32.mrf.mxu0
        %577 = vdwg.mxu0
        %v578 = vadd.f32 %v575, %v346
        %v579 = vtanh.pop %v578
        %s580 = scalar_lea.vmem %s316, 32 [#allocation11]
        %581 = vst [vmem:[%s580] sm:$0xff] %v579
        %s582 = scalar_lea.vmem %s274, 20 [#allocation3]
        %v583 = vld [vmem:[%s582] sm:$0xf]
        %v584 = vpack.c.bf16 %v579, %v579
        %585 = vmatpush.bf16.msra.mxu0 %v390
        %586 = vmatpush.bf16.msra.mxu0 %v389
        %587 = vmatpush.bf16.msra.mxu0 %v388
        %588 = vmatpush.bf16.msra.mxu0 %v387
        %589 = vmatpush.bf16.msra.mxu0 %v386
        %590 = vmatpush.bf16.msra.mxu0 %v385
        %591 = vmatpush.bf16.msra.mxu0 %v384
        %592 = vmatpush.bf16.msra.mxu0 %v383
        %593 = vmatmul.bf16.gmra.mxu0 %v584
        %v594 = vpop.f32.mrf.mxu0
        %v595 = vadd.f32 0.0, %v594
        %v596 = vpop.f32.mrf.mxu0
        %597 = vdwg.mxu0
        %v599 = vsel %vm418, %v583, 0
        %601 = vmatpush.bf16.msra.mxu0 0
        %602 = vmatpush.bf16.msra.mxu0 0
        %603 = vmatpush.bf16.msra.mxu0 0
        %604 = vmatpush.bf16.msra.mxu0 0
        %605 = vmatpush.bf16.msra.mxu0 0
        %606 = vmatpush.bf16.msra.mxu0 0
        %607 = vmatpush.bf16.msra.mxu0 0
        %608 = vmatpush.bf16.msra.mxu0 %v416
        %609 = vmatmul.bf16.gmra.mxu0 %v599
        %v610 = vpop.f32.mrf.mxu0
        %v611 = vadd.f32 %v595, %v610
        %v612 = vpop.f32.mrf.mxu0
        %613 = vdwg.mxu0
        %v614 = vadd.f32 %v611, %v346
        %v615 = vtanh.pop %v614
        %s616 = scalar_lea.vmem %s316, 40 [#allocation11]
        %617 = vst [vmem:[%s616] sm:$0xff] %v615
        %s618 = scalar_lea.vmem %s274, 24 [#allocation3]
        %v619 = vld [vmem:[%s618] sm:$0xf]
        %v620 = vpack.c.bf16 %v615, %v615
        %621 = vmatpush.bf16.msra.mxu0 %v390
        %622 = vmatpush.bf16.msra.mxu0 %v389
        %623 = vmatpush.bf16.msra.mxu0 %v388
        %624 = vmatpush.bf16.msra.mxu0 %v387
        %625 = vmatpush.bf16.msra.mxu0 %v386
        %626 = vmatpush.bf16.msra.mxu0 %v385
        %627 = vmatpush.bf16.msra.mxu0 %v384
        %628 = vmatpush.bf16.msra.mxu0 %v383
        %629 = vmatmul.bf16.gmra.mxu0 %v620
        %v630 = vpop.f32.mrf.mxu0
        %v631 = vadd.f32 0.0, %v630
        %v632 = vpop.f32.mrf.mxu0
        %633 = vdwg.mxu0
        %v635 = vsel %vm418, %v619, 0
        %637 = vmatpush.bf16.msra.mxu0 0
        %638 = vmatpush.bf16.msra.mxu0 0
        %639 = vmatpush.bf16.msra.mxu0 0
        %640 = vmatpush.bf16.msra.mxu0 0
        %641 = vmatpush.bf16.msra.mxu0 0
        %642 = vmatpush.bf16.msra.mxu0 0
        %643 = vmatpush.bf16.msra.mxu0 0
        %644 = vmatpush.bf16.msra.mxu0 %v416
        %645 = vmatmul.bf16.gmra.mxu0 %v635
        %v646 = vpop.f32.mrf.mxu0
        %v647 = vadd.f32 %v631, %v646
        %v648 = vpop.f32.mrf.mxu0
        %649 = vdwg.mxu0
        %v650 = vadd.f32 %v647, %v346
        %v651 = vtanh.pop %v650
        %s652 = scalar_lea.vmem %s316, 48 [#allocation11]
        %653 = vst [vmem:[%s652] sm:$0xff] %v651
        %s654 = scalar_lea.vmem %s274, 28 [#allocation3]
        %v655 = vld [vmem:[%s654] sm:$0xf]
        %v656 = vpack.c.bf16 %v651, %v651
        %657 = vmatpush.bf16.msra.mxu0 %v390
        %658 = vmatpush.bf16.msra.mxu0 %v389
        %659 = vmatpush.bf16.msra.mxu0 %v388
        %660 = vmatpush.bf16.msra.mxu0 %v387
        %661 = vmatpush.bf16.msra.mxu0 %v386
        %662 = vmatpush.bf16.msra.mxu0 %v385
        %663 = vmatpush.bf16.msra.mxu0 %v384
        %664 = vmatpush.bf16.msra.mxu0 %v383
        %665 = vmatmul.bf16.gmra.mxu0 %v656
        %v666 = vpop.f32.mrf.mxu0
        %v667 = vadd.f32 0.0, %v666
        %v668 = vpop.f32.mrf.mxu0
        %669 = vdwg.mxu0
        %v671 = vsel %vm418, %v655, 0
        %673 = vmatpush.bf16.msra.mxu0 0
        %674 = vmatpush.bf16.msra.mxu0 0
        %675 = vmatpush.bf16.msra.mxu0 0
        %676 = vmatpush.bf16.msra.mxu0 0
        %677 = vmatpush.bf16.msra.mxu0 0
        %678 = vmatpush.bf16.msra.mxu0 0
        %679 = vmatpush.bf16.msra.mxu0 0
        %680 = vmatpush.bf16.msra.mxu0 %v416
        %681 = vmatmul.bf16.gmra.mxu0 %v671
        %v682 = vpop.f32.mrf.mxu0
        %v683 = vadd.f32 %v667, %v682
        %v684 = vpop.f32.mrf.mxu0
        %685 = vdwg.mxu0
        %v686 = vadd.f32 %v683, %v346
        %v687 = vtanh.pop %v686
        %s688 = scalar_lea.vmem %s316, 56 [#allocation11]
        %689 = vst [vmem:[%s688] sm:$0xff] %v687
        %690 = vst [vmem:[#allocation2] sm:$0xff] %v687
        %s691 = sand.u32 %s163, 1
        %s692 = scalar_lea.sflag [#allocation5], %s691
        %s693 = sand.u32 %s163, 1
        %s694 = smul.addr %s693, 64
        %s695 = scalar_lea.vmem [#allocation11], %s694
        // Predicated region
        $region61: #{tpu_custom_call.1} parent=39 // pred_check
          %p696 = pneg %p173
        $region62: #{tpu_custom_call.1} parent=39 // pred_check_branch
          %698 = sbr.rel (%p696) target = $region64
        $region63: #{tpu_custom_call.1} parent=39 // pred_region
          %s699 = smul.u32 8, %s29
          %701 = vsyncadd %s692, 0
          %s702 = sadd.s32 %s28, %s699
          %s703 = smul.addr %s702, 8
          %s704 = scalar_lea.hbm %s5, %s703
          %s705 = sshll.u32 %s695, 4
          %s706 = int_to_ptr.vmem [resolvable:$true] %s705
          %s707 = sshll.u32 %s704, 4
          %s708 = int_to_ptr.hbm [resolvable:$true] %s707
          %713 = dma.vmem_to_hbm [thread:$0]  %s706, 1024, %s708, %s692, 128, 128, 8
        $region64: #{tpu_custom_call.1} parent=39 // pred_fallthru
          _
      $region40: #{tpu_custom_call.1} parent=5 // pred_fallthru
        _
      %p714 = scmp.le.s32.totalorder 2, %s19
      // Predicated region
      $region65: #{tpu_custom_call.1} parent=5 // pred_check
        %p715 = pneg %p714
      $region66: #{tpu_custom_call.1} parent=5 // pred_check_branch
        %717 = sbr.rel (%p715) target = $region68
      $region67: #{tpu_custom_call.1} parent=5 // pred_region
        %s718 = ssub.s32 %s19, 2
        // Predicated region
        $region69: #{tpu_custom_call.1} parent=67 // pred_check
          %p719 = pneg %p179
        $region70: #{tpu_custom_call.1} parent=67 // pred_check_branch
          %721 = sbr.rel (%p719) target = $region72
        $region71: #{tpu_custom_call.1} parent=67 // pred_region
          %s722 = sand.u32 %s164, 1
          %s723 = scalar_lea.sflag [#allocation5], %s722
          %s724 = sand.u32 %s164, 1
          %s725 = smul.addr %s724, 64
          %s726 = scalar_lea.vmem [#allocation11], %s725
          %728 = dma.done %s723, 1024
        $region72: #{tpu_custom_call.1} parent=67 // pred_fallthru
          _
      $region68: #{tpu_custom_call.1} parent=5 // pred_fallthru
        _
    $region6: #{tpu_custom_call.1} parent=1 // loop_footer
      %s23 = sadd.s32 1, %s19
    $region7: #{tpu_custom_call.1} parent=1 // loop_footer_branch
      %18 = sbr.rel target = $region3
    $region8: #{tpu_custom_call.1} parent=1 // loop_exit
      _
    %729 = vsyncpa [#allocation4], 1
    %s730 = scalar_lea.sflag [#allocation4], 1
    %731 = vsyncpa %s730, 1
    %732 = vsyncpa [#allocation7], 1
    %733 = vsyncpa [#allocation10], 1
    %734 = vsyncpa [#allocation5], 1
    %s735 = scalar_lea.sflag [#allocation5], 1
    %736 = vsyncpa %s735, 1

</llo_original>
